<compile_context>
chip_gen: v7x
topology: tpu7x:2x2x1
jax: 0.10.0
libtpu: 0.0.40
codegen_flags: <defaults>
</compile_context>

<pallas_src>
import jax
import jax.numpy as jnp
from jax.experimental import pallas as pl
from jax.experimental.pallas import tpu as pltpu

LANES = 128   # vreg lane width; hidden dims are zero-padded to this in the slabs
F_IN = 10     # fc1 input features
OUT_DIM = 2   # fc3 output features


def _round_up(n, m):
    return (n + m - 1) // m * m


def mlp_kernel(x_ref, w_ref, b_ref, o_ref):
    # x_ref: (TILE_B, 10) f32   w_ref: (3, 128, 128) bf16
    # b_ref: (3, 1, 128) f32    o_ref: (TILE_B, 2) f32
    x = x_ref[...].astype(jnp.bfloat16)                      # (TILE_B, 10)

    # fc1 + ReLU — narrow-K (K=10) bf16 MXU matmul, f32 accumulate.  Mosaic masks
    # the padded contracting lanes; slab rows >= 10 are zero-padding anyway.
    w1 = w_ref[0][:F_IN, :]                                  # (10, 128)
    h = jnp.dot(x, w1, preferred_element_type=jnp.float32)
    h = jnp.maximum(h + b_ref[0], 0.0)

    # fc2 + ReLU — padded lanes stay exactly zero (zero bias pad + zero weight rows).
    h = jnp.dot(h.astype(jnp.bfloat16), w_ref[1], preferred_element_type=jnp.float32)
    h = jnp.maximum(h + b_ref[1], 0.0)

    # fc3 (no activation) — only the first OUT_DIM lanes are written back to HBM.
    h = jnp.dot(h.astype(jnp.bfloat16), w_ref[2], preferred_element_type=jnp.float32)
    h = h + b_ref[2]
    o_ref[...] = h[:, :OUT_DIM].astype(o_ref.dtype)          # narrow (TILE_B, 2) store


def pack_params(params):
    """Pack the 6 tiny Linear params into two lane-padded slabs.  Call ONCE at init."""
    def pad2(a, rows, cols):
        return jnp.pad(a, ((0, rows - a.shape[0]), (0, cols - a.shape[1])))

    w_pack = jnp.stack([pad2(params[f"w{i}"], LANES, LANES) for i in (1, 2, 3)]
                       ).astype(jnp.bfloat16)                 # (3, 128, 128) bf16
    b_pack = jnp.stack([pad2(params[f"b{i}"], 1, LANES) for i in (1, 2, 3)]
                       ).astype(jnp.float32)                  # (3, 1, 128) f32
    return w_pack, b_pack


def simple_test_net(x, w_pack, b_pack, *, tile_b=1024, small_batch_threshold=0):
    """x: (B, 10) float32.  w_pack/b_pack: output of pack_params (packed once)."""
    B, f_in = x.shape
    assert f_in == F_IN, f_in

    if B < small_batch_threshold:
        # Tiny batches: launch + per-step overhead dominate — fused XLA path wins.
        h = jnp.maximum(x @ w_pack[0, :F_IN].astype(jnp.float32) + b_pack[0], 0.0)
        h = jnp.maximum(h @ w_pack[1].astype(jnp.float32) + b_pack[1], 0.0)
        h = h @ w_pack[2].astype(jnp.float32) + b_pack[2]
        return h[:, :OUT_DIM]

    # Batch tiling: multiple of 8 sublanes, capped at ceil(B/2) rounded to 8 so
    # the grid has >= 2 steps whenever B > 8 (v7x megacore) and pad waste stays small.
    tile_b = max(8, min(tile_b, _round_up((B + 1) // 2, 8)))
    b_pad = _round_up(B, tile_b)
    x_p = x if b_pad == B else jnp.pad(x, ((0, b_pad - B), (0, 0)))  # row-pad only

    grid = (b_pad // tile_b,)
    out = pl.pallas_call(
        mlp_kernel,
        out_shape=jax.ShapeDtypeStruct((b_pad, OUT_DIM), jnp.float32),
        grid=grid,
        in_specs=[
            pl.BlockSpec((tile_b, F_IN), lambda i: (i, 0)),           # x tile, native width
            pl.BlockSpec((3, LANES, LANES), lambda i: (0, 0, 0)),     # weights (VMEM-resident)
            pl.BlockSpec((3, 1, LANES), lambda i: (0, 0, 0)),         # biases  (VMEM-resident)
        ],
        out_specs=pl.BlockSpec((tile_b, OUT_DIM), lambda i: (i, 0)),  # narrow output
        compiler_params=pltpu.CompilerParams(
            dimension_semantics=("parallel",),   # shard batch grid across v7x TCs; no-op v5e/v6e
        ),
    )(x_p, w_pack, b_pack)

    return out if b_pad == B else out[:B]


def init_params(key):
    """Deterministic init mimicking PyTorch Linear default (U[-1/sqrt(fan_in), 1/sqrt(fan_in)])."""
    dims = [(10, 20), (20, 10), (10, 2)]
    params = {}
    for i, (fan_in, fan_out) in enumerate(dims, start=1):
        key, kw, kb = jax.random.split(key, 3)
        bound = 1.0 / jnp.sqrt(fan_in)
        # stored already transposed: (in, out)
        params[f"w{i}"] = jax.random.uniform(
            kw, (fan_in, fan_out), jnp.float32, -bound, bound)
        params[f"b{i}"] = jax.random.uniform(
            kb, (1, fan_out), jnp.float32, -bound, bound)
    return params


def reference(x, p):
    h1 = jax.nn.relu(x @ p["w1"] + p["b1"])
    h2 = jax.nn.relu(h1 @ p["w2"] + p["b2"])
    return h2 @ p["w3"] + p["b3"]


if __name__ == "__main__":
    key = jax.random.PRNGKey(0)
    key, kx, kx2 = jax.random.split(key, 3)
    params = init_params(key)
    w_pack, b_pack = pack_params(params)        # packed once, outside the per-call path

    # Small-batch check (single grid step); force the kernel path for the test.
    B = 8
    x = jax.random.normal(kx, (B, 10), jnp.float32)
    out = jax.block_until_ready(
        simple_test_net(x, w_pack, b_pack, small_batch_threshold=0))
    ref = reference(x, params)
    assert out.shape == (B, 2), out.shape
    # bf16 inputs/weights with f32 accumulation -> looser tolerance than pure f32.
    assert jnp.allclose(out, ref, atol=3e-2, rtol=3e-2), (
        "mismatch vs reference", float(jnp.max(jnp.abs(out - ref))))

    # Larger batch exercises the multi-step ("parallel") grid + narrow output path.
    B2 = 640
    x2 = jax.random.normal(kx2, (B2, 10), jnp.float32)
    out2 = jax.block_until_ready(
        simple_test_net(x2, w_pack, b_pack, small_batch_threshold=0))
    ref2 = reference(x2, params)
    assert out2.shape == (B2, 2), out2.shape
    assert jnp.allclose(out2, ref2, atol=3e-2, rtol=3e-2), (
        "mismatch vs reference (B=640)", float(jnp.max(jnp.abs(out2 - ref2))))

    print("KERNEL_OK")
</pallas_src>

<mosaic_0001>
module attributes {stable_mosaic.version = 11 : i64} {
  func.func @mlp_kernel(%arg0: i32, %arg1: memref<8x10xf32, #tpu.memory_space<vmem>>, %arg2: memref<3x128x128xbf16, #tpu.memory_space<vmem>>, %arg3: memref<3x1x128xf32, #tpu.memory_space<vmem>>, %arg4: memref<8x2xf32, #tpu.memory_space<vmem>>) attributes {dimension_semantics = [#tpu.dimension_semantics<parallel>], iteration_bounds = array<i64: 1>, scalar_prefetch = 0 : i64, scratch_operands = 0 : i64, tpu.core_type = #tpu.core_type<tc>, window_params = [{transform_indices = @transform_0, window_bounds = array<i64: 8, 10>}, {pipeline_mode = #tpu.pipeline_mode<synchronous>, transform_indices = @transform_1, window_bounds = array<i64: 3, 128, 128>}, {pipeline_mode = #tpu.pipeline_mode<synchronous>, transform_indices = @transform_2, window_bounds = array<i64: 3, 1, 128>}, {transform_indices = @transform_3, window_bounds = array<i64: 8, 2>}]} {
    %c0 = arith.constant 0 : index
    %c0_0 = arith.constant 0 : index
    %0 = vector.load %arg1[%c0, %c0_0] : memref<8x10xf32, #tpu.memory_space<vmem>>, vector<8x10xf32>
    %1 = arith.truncf %0 : vector<8x10xf32> to vector<8x10xbf16>
    %c0_1 = arith.constant 0 : index
    %c0_2 = arith.constant 0 : index
    %c0_3 = arith.constant 0 : index
    %2 = vector.load %arg2[%c0_1, %c0_2, %c0_3] : memref<3x128x128xbf16, #tpu.memory_space<vmem>>, vector<1x128x128xbf16>
    %3 = vector.shape_cast %2 : vector<1x128x128xbf16> to vector<128x128xbf16>
    %4 = vector.extract_strided_slice %3 {offsets = [0, 0], sizes = [10, 128], strides = [1, 1]} : vector<128x128xbf16> to vector<10x128xbf16>
    %cst = arith.constant dense<0.000000e+00> : vector<8x128xf32>
    %5 = tpu.matmul %1, %4, %cst {dimension_numbers = #tpu.dot_dimension_numbers<[1], [0], [0], [1], [0, 0, 1, 1], [], []>} : vector<8x10xbf16>, vector<10x128xbf16>, vector<8x128xf32> -> vector<8x128xf32>
    %c0_4 = arith.constant 0 : index
    %c0_5 = arith.constant 0 : index
    %c0_6 = arith.constant 0 : index
    %6 = vector.load %arg3[%c0_4, %c0_5, %c0_6] : memref<3x1x128xf32, #tpu.memory_space<vmem>>, vector<1x1x128xf32>
    %7 = vector.shape_cast %6 : vector<1x1x128xf32> to vector<1x128xf32>
    %8 = vector.broadcast %7 : vector<1x128xf32> to vector<8x128xf32>
    %9 = arith.addf %5, %8 : vector<8x128xf32>
    %cst_7 = arith.constant 0.000000e+00 : f32
    %10 = vector.broadcast %cst_7 : f32 to vector<8x128xf32>
    %11 = arith.maximumf %9, %10 : vector<8x128xf32>
    %12 = arith.truncf %11 : vector<8x128xf32> to vector<8x128xbf16>
    %c1 = arith.constant 1 : index
    %c0_8 = arith.constant 0 : index
    %c0_9 = arith.constant 0 : index
    %13 = vector.load %arg2[%c1, %c0_8, %c0_9] : memref<3x128x128xbf16, #tpu.memory_space<vmem>>, vector<1x128x128xbf16>
    %14 = vector.shape_cast %13 : vector<1x128x128xbf16> to vector<128x128xbf16>
    %cst_10 = arith.constant dense<0.000000e+00> : vector<8x128xf32>
    %15 = tpu.matmul %12, %14, %cst_10 {dimension_numbers = #tpu.dot_dimension_numbers<[1], [0], [0], [1], [0, 0, 1, 1], [], []>} : vector<8x128xbf16>, vector<128x128xbf16>, vector<8x128xf32> -> vector<8x128xf32>
    %c1_11 = arith.constant 1 : index
    %c0_12 = arith.constant 0 : index
    %c0_13 = arith.constant 0 : index
    %16 = vector.load %arg3[%c1_11, %c0_12, %c0_13] : memref<3x1x128xf32, #tpu.memory_space<vmem>>, vector<1x1x128xf32>
    %17 = vector.shape_cast %16 : vector<1x1x128xf32> to vector<1x128xf32>
    %18 = vector.broadcast %17 : vector<1x128xf32> to vector<8x128xf32>
    %19 = arith.addf %15, %18 : vector<8x128xf32>
    %cst_14 = arith.constant 0.000000e+00 : f32
    %20 = vector.broadcast %cst_14 : f32 to vector<8x128xf32>
    %21 = arith.maximumf %19, %20 : vector<8x128xf32>
    %22 = arith.truncf %21 : vector<8x128xf32> to vector<8x128xbf16>
    %c2 = arith.constant 2 : index
    %c0_15 = arith.constant 0 : index
    %c0_16 = arith.constant 0 : index
    %23 = vector.load %arg2[%c2, %c0_15, %c0_16] : memref<3x128x128xbf16, #tpu.memory_space<vmem>>, vector<1x128x128xbf16>
    %24 = vector.shape_cast %23 : vector<1x128x128xbf16> to vector<128x128xbf16>
    %cst_17 = arith.constant dense<0.000000e+00> : vector<8x128xf32>
    %25 = tpu.matmul %22, %24, %cst_17 {dimension_numbers = #tpu.dot_dimension_numbers<[1], [0], [0], [1], [0, 0, 1, 1], [], []>} : vector<8x128xbf16>, vector<128x128xbf16>, vector<8x128xf32> -> vector<8x128xf32>
    %c2_18 = arith.constant 2 : index
    %c0_19 = arith.constant 0 : index
    %c0_20 = arith.constant 0 : index
    %26 = vector.load %arg3[%c2_18, %c0_19, %c0_20] : memref<3x1x128xf32, #tpu.memory_space<vmem>>, vector<1x1x128xf32>
    %27 = vector.shape_cast %26 : vector<1x1x128xf32> to vector<1x128xf32>
    %28 = vector.broadcast %27 : vector<1x128xf32> to vector<8x128xf32>
    %29 = arith.addf %25, %28 : vector<8x128xf32>
    %30 = vector.extract_strided_slice %29 {offsets = [0, 0], sizes = [8, 2], strides = [1, 1]} : vector<8x128xf32> to vector<8x2xf32>
    %c0_21 = arith.constant 0 : index
    %c0_22 = arith.constant 0 : index
    %31 = vector.load %arg4[%c0_21, %c0_22] : memref<8x2xf32, #tpu.memory_space<vmem>>, vector<8x2xf32>
    tpu.vector_store %arg4[%c0_21, %c0_22], %30 {strides = array<i32>} : memref<8x2xf32, #tpu.memory_space<vmem>>, vector<8x2xf32>,
    return
  }
  func.func @transform_0(%arg0: i32) -> (i32, i32) {
    %c0_i32 = arith.constant 0 : i32
    %c0_i32_0 = arith.constant 0 : i32
    return %arg0, %c0_i32 : i32, i32
  }
  func.func @transform_1(%arg0: i32) -> (i32, i32, i32) {
    %c0_i32 = arith.constant 0 : i32
    %c0_i32_0 = arith.constant 0 : i32
    %c0_i32_1 = arith.constant 0 : i32
    %c0_i32_2 = arith.constant 0 : i32
    return %c0_i32, %c0_i32_0, %c0_i32_1 : i32, i32, i32
  }
  func.func @transform_2(%arg0: i32) -> (i32, i32, i32) {
    %c0_i32 = arith.constant 0 : i32
    %c0_i32_0 = arith.constant 0 : i32
    %c0_i32_1 = arith.constant 0 : i32
    %c0_i32_2 = arith.constant 0 : i32
    return %c0_i32, %c0_i32_0, %c0_i32_1 : i32, i32, i32
  }
  func.func @transform_3(%arg0: i32) -> (i32, i32) {
    %c0_i32 = arith.constant 0 : i32
    %c0_i32_0 = arith.constant 0 : i32
    return %arg0, %c0_i32 : i32, i32
  }
}

</mosaic_0001>

<llo_original>
// kernel: tpu_custom_call.1
$region0: #{tpu_custom_call.1}
  #allocation0 [shape = 'u32[]', space=smem, size = 0x4, offset = 0x4, fixed_abs, tag = 'smem constant byte address 0x4 - core index']
  #allocation1 [shape = 'u32[144,128]{1,0:T(1,128)}', space=vmem, size = 0x12000, scoped, tag = 'internal scratch']
  %s0 = inlined_call_operand.hbm [shape: f32[8,10], index: 0, kind: input, shape index: {}]
  %s1 = inlined_call_operand.hbm [shape: bf16[3,128,128], index: 1, kind: input, shape index: {}]
  %s2 = inlined_call_operand.vmem [shape: f32[3,1,128], index: 2, kind: input, shape index: {}]
  %s3 = inlined_call_operand.vmem [shape: f32[8,2], index: 3, kind: output, shape index: {}]
  %s4 = sld [smem:[#allocation0]]
  $region30: #{tpu_custom_call.1} parent=0
    _
  %s6 = ssub.s32 1, %s4
  %s7 = scalar_select 0, %s6, %s4
  $region1: #{tpu_custom_call.1} parent=0
    #allocation2 [shape = 'u8[4096]{0}', space=vmem, size = 0x1000, scoped, tag = 'input window, operand 0, single buffered']
    #allocation3 [shape = 's32[1]{0}', space=sflag, size = 0x4, scoped, tag = 'scoped memory for tpu_custom_call.1']
    #allocation4 [shape = 'u8[98304]{0}', space=vmem, size = 0x18000, scoped, tag = 'input window, operand 1, single buffered']
    #allocation5 [shape = 's32[1]{0}', space=sflag, size = 0x4, scoped, tag = 'scoped memory for tpu_custom_call.1']
    %8 = vsyncpa [#allocation3], 0
    %9 = vsyncpa [#allocation5], 0
    // Predicated region
    $region2: #{tpu_custom_call.1} parent=1 // pred_check
      _
    $region3: #{tpu_custom_call.1} parent=1 // pred_check_branch
      %11 = sbr.rel (0) target = $region5
    $region4: #{tpu_custom_call.1} parent=1 // pred_region
      %s13 = ssub.s32 128, 128
      %14 = vsyncadd [#allocation3], %s13
      %s16 = sshll.u32 [#allocation2], 4
      %s17 = int_to_ptr.vmem [resolvable:$true] %s16
      %19 = dma.hbm_to_vmem [thread:$0]  %s0, 128, %s17, [#allocation3]
    $region5: #{tpu_custom_call.1} parent=1 // pred_fallthru
      _
    // Predicated region
    $region6: #{tpu_custom_call.1} parent=1 // pred_check
      _
    $region7: #{tpu_custom_call.1} parent=1 // pred_check_branch
      %21 = sbr.rel (0) target = $region9
    $region8: #{tpu_custom_call.1} parent=1 // pred_region
      %s23 = ssub.s32 3072, 3072
      %24 = vsyncadd [#allocation5], %s23
      %s25 = sshll.u32 [#allocation4], 4
      %s26 = int_to_ptr.vmem [resolvable:$true] %s25
      %31 = dma.hbm_to_vmem [thread:$0]  %s1, 3072, %s26, [#allocation5], 64, 64, 4
    $region9: #{tpu_custom_call.1} parent=1 // pred_fallthru
      _
    // Predicated region
    $region10: #{tpu_custom_call.1} parent=1 // pred_check
      _
    $region11: #{tpu_custom_call.1} parent=1 // pred_check_branch
      %33 = sbr.rel (0) target = $region13
    $region12: #{tpu_custom_call.1} parent=1 // pred_region
      _
    $region13: #{tpu_custom_call.1} parent=1 // pred_fallthru
      _
    // Predicated region
    $region14: #{tpu_custom_call.1} parent=1 // pred_check
      _
    $region15: #{tpu_custom_call.1} parent=1 // pred_check_branch
      %35 = sbr.rel (0) target = $region17
    $region16: #{tpu_custom_call.1} parent=1 // pred_region
      %36 = dma.done [#allocation3], 128
    $region17: #{tpu_custom_call.1} parent=1 // pred_fallthru
      _
    // Predicated region
    $region18: #{tpu_custom_call.1} parent=1 // pred_check
      _
    $region19: #{tpu_custom_call.1} parent=1 // pred_check_branch
      %38 = sbr.rel (0) target = $region21
    $region20: #{tpu_custom_call.1} parent=1 // pred_region
      %39 = dma.done [#allocation5], 3072
    $region21: #{tpu_custom_call.1} parent=1 // pred_fallthru
      _
    %v41 = vld [vmem:[#allocation2] sm:$0xff]
    %v42 = vpack.c.bf16 %v41, %v41
    %v43 = vld [vmem:[#allocation4] sm:$0xf]
    %v44 = vld [vmem:[#allocation4 + $0x4] sm:$0xf]
    %v45 = vld [vmem:[%s2] sm:$0x1]
    %v47 = vlaneseq
    %v48 = vshrl.u32 %v47, 7
    %v49 = vsub.s32 0, %v48
    %v50 = vrot.slane %v45, %v49
    %v54 = vunpack.c.l.b16 %v43
    %v55 = vunpack.c.l.b16 %v44
    %v56 = vpack.c.b16 %v55, %v54
    %vm57 = vcmask 80896
    %v59 = vsel %vm57, %v42, 0
    %vm61 = vcmask 1044480
    %v63 = vsel %vm61, %v56, 0
    %65 = vmatprep.subr.bf16.mxu0 0
    %66 = vmatpush1.bf16.msra.mxu0 %v63
    %67 = vmatprep.subr.bf16.mxu0 0
    %68 = vmatpush1.bf16.msra.mxu0 0
    %69 = vmatprep.subr.bf16.mxu0 0
    %70 = vmatpush1.bf16.msra.mxu0 0
    %71 = vmatprep.subr.bf16.mxu0 0
    %72 = vmatpush1.bf16.msra.mxu0 0
    %73 = vmatprep.subr.bf16.mxu0 0
    %74 = vmatpush1.bf16.msra.mxu0 0
    %75 = vmatprep.subr.bf16.mxu0 0
    %76 = vmatpush1.bf16.msra.mxu0 0
    %77 = vmatprep.subr.bf16.mxu0 0
    %78 = vmatpush1.bf16.msra.mxu0 0
    %79 = vmatprep.subr.bf16.mxu0 0
    %80 = vmatpush1.bf16.msra.mxu0 0
    %81 = vmatprep.subr.bf16.mxu0 0
    %82 = vmatpush1.bf16.msra.mxu0 0
    %83 = vmatprep.subr.bf16.mxu0 0
    %84 = vmatpush1.bf16.msra.mxu0 0
    %85 = vmatprep.subr.bf16.mxu0 0
    %86 = vmatpush1.bf16.msra.mxu0 0
    %87 = vmatprep.subr.bf16.mxu0 0
    %88 = vmatpush1.bf16.msra.mxu0 0
    %89 = vmatprep.subr.bf16.mxu0 0
    %90 = vmatpush1.bf16.msra.mxu0 0
    %91 = vmatprep.subr.bf16.mxu0 0
    %92 = vmatpush1.bf16.msra.mxu0 0
    %93 = vmatprep.subr.bf16.mxu0 0
    %94 = vmatpush1.bf16.msra.mxu0 0
    %95 = vmatprep.subr.bf16.mxu0 0
    %96 = vmatpush1.bf16.msra.mxu0 0
    %97 = vmatprep.mubr.bf16.mxu0 0
    %98 = vmatmul.mubr.bf16.gmra.mrb[0].mxu0 %v59
    %v99 = vpop.f32.mrb[0].mxu0
    %v100 = vadd.f32 %v50, %v99
    %v101 = vpop.f32.mrb[0].mxu0
    %v102 = vpop.f32.mrb[0].mxu0
    %v103 = vpop.f32.mrb[0].mxu0
    %104 = vdwg.mxu0
    %v105 = vmax.f32 %v100, 0.0
    %v106 = vpack.c.bf16 %v105, %v105
    %s107 = scalar_lea.vmem [#allocation4], 64
    %v108 = vld [vmem:[%s107] sm:$0xf]
    %v109 = vld [vmem:[%s107 + $0x4] sm:$0xf]
    %v110 = vld [vmem:[%s107 + $0x8] sm:$0xf]
    %v111 = vld [vmem:[%s107 + $0xc] sm:$0xf]
    %v112 = vld [vmem:[%s107 + $0x10] sm:$0xf]
    %v113 = vld [vmem:[%s107 + $0x14] sm:$0xf]
    %v114 = vld [vmem:[%s107 + $0x18] sm:$0xf]
    %v115 = vld [vmem:[%s107 + $0x1c] sm:$0xf]
    %v116 = vld [vmem:[%s107 + $0x20] sm:$0xf]
    %v117 = vld [vmem:[%s107 + $0x24] sm:$0xf]
    %v118 = vld [vmem:[%s107 + $0x28] sm:$0xf]
    %v119 = vld [vmem:[%s107 + $0x2c] sm:$0xf]
    %v120 = vld [vmem:[%s107 + $0x30] sm:$0xf]
    %v121 = vld [vmem:[%s107 + $0x34] sm:$0xf]
    %v122 = vld [vmem:[%s107 + $0x38] sm:$0xf]
    %v123 = vld [vmem:[%s107 + $0x3c] sm:$0xf]
    %s124 = scalar_lea.vmem %s2, 1
    %v125 = vld [vmem:[%s124] sm:$0x1]
    %v127 = vlaneseq
    %v128 = vshrl.u32 %v127, 7
    %v129 = vsub.s32 0, %v128
    %v130 = vrot.slane %v125, %v129
    %v148 = vunpack.c.l.b16 %v108
    %v149 = vunpack.c.l.b16 %v109
    %v150 = vunpack.c.l.b16 %v110
    %v151 = vunpack.c.l.b16 %v111
    %v152 = vunpack.c.l.b16 %v112
    %v153 = vunpack.c.l.b16 %v113
    %v154 = vunpack.c.l.b16 %v114
    %v155 = vunpack.c.l.b16 %v115
    %v156 = vunpack.c.l.b16 %v116
    %v157 = vunpack.c.l.b16 %v117
    %v158 = vunpack.c.l.b16 %v118
    %v159 = vunpack.c.l.b16 %v119
    %v160 = vunpack.c.l.b16 %v120
    %v161 = vunpack.c.l.b16 %v121
    %v162 = vunpack.c.l.b16 %v122
    %v163 = vunpack.c.l.b16 %v123
    %v164 = vpack.c.b16 %v149, %v148
    %v165 = vpack.c.b16 %v151, %v150
    %v166 = vpack.c.b16 %v153, %v152
    %v167 = vpack.c.b16 %v155, %v154
    %v168 = vpack.c.b16 %v157, %v156
    %v169 = vpack.c.b16 %v159, %v158
    %v170 = vpack.c.b16 %v161, %v160
    %v171 = vpack.c.b16 %v163, %v162
    %180 = vmatprep.subr.bf16.mxu0 0
    %181 = vmatpush1.bf16.msra.mxu0 %v164
    %182 = vmatprep.subr.bf16.mxu0 0
    %183 = vmatpush1.bf16.msra.mxu0 %v165
    %184 = vmatprep.subr.bf16.mxu0 0
    %185 = vmatpush1.bf16.msra.mxu0 %v166
    %186 = vmatprep.subr.bf16.mxu0 0
    %187 = vmatpush1.bf16.msra.mxu0 %v167
    %188 = vmatprep.subr.bf16.mxu0 0
    %189 = vmatpush1.bf16.msra.mxu0 %v168
    %190 = vmatprep.subr.bf16.mxu0 0
    %191 = vmatpush1.bf16.msra.mxu0 %v169
    %192 = vmatprep.subr.bf16.mxu0 0
    %193 = vmatpush1.bf16.msra.mxu0 %v170
    %194 = vmatprep.subr.bf16.mxu0 0
    %195 = vmatpush1.bf16.msra.mxu0 %v171
    %196 = vmatprep.subr.bf16.mxu0 0
    %197 = vmatpush1.bf16.msra.mxu0 0
    %198 = vmatprep.subr.bf16.mxu0 0
    %199 = vmatpush1.bf16.msra.mxu0 0
    %200 = vmatprep.subr.bf16.mxu0 0
    %201 = vmatpush1.bf16.msra.mxu0 0
    %202 = vmatprep.subr.bf16.mxu0 0
    %203 = vmatpush1.bf16.msra.mxu0 0
    %204 = vmatprep.subr.bf16.mxu0 0
    %205 = vmatpush1.bf16.msra.mxu0 0
    %206 = vmatprep.subr.bf16.mxu0 0
    %207 = vmatpush1.bf16.msra.mxu0 0
    %208 = vmatprep.subr.bf16.mxu0 0
    %209 = vmatpush1.bf16.msra.mxu0 0
    %210 = vmatprep.subr.bf16.mxu0 0
    %211 = vmatpush1.bf16.msra.mxu0 0
    %212 = vmatprep.mubr.bf16.mxu0 0
    %213 = vmatmul.mubr.bf16.gmra.mrb[0].mxu0 %v106
    %v214 = vpop.f32.mrb[0].mxu0
    %v215 = vadd.f32 %v130, %v214
    %v216 = vpop.f32.mrb[0].mxu0
    %v217 = vpop.f32.mrb[0].mxu0
    %v218 = vpop.f32.mrb[0].mxu0
    %219 = vdwg.mxu0
    %v220 = vmax.f32 %v215, 0.0
    %v221 = vpack.c.bf16 %v220, %v220
    %s222 = scalar_lea.vmem [#allocation4], 128
    %v223 = vld [vmem:[%s222] sm:$0xf]
    %v224 = vld [vmem:[%s222 + $0x4] sm:$0xf]
    %v225 = vld [vmem:[%s222 + $0x8] sm:$0xf]
    %v226 = vld [vmem:[%s222 + $0xc] sm:$0xf]
    %v227 = vld [vmem:[%s222 + $0x10] sm:$0xf]
    %v228 = vld [vmem:[%s222 + $0x14] sm:$0xf]
    %v229 = vld [vmem:[%s222 + $0x18] sm:$0xf]
    %v230 = vld [vmem:[%s222 + $0x1c] sm:$0xf]
    %v231 = vld [vmem:[%s222 + $0x20] sm:$0xf]
    %v232 = vld [vmem:[%s222 + $0x24] sm:$0xf]
    %v233 = vld [vmem:[%s222 + $0x28] sm:$0xf]
    %v234 = vld [vmem:[%s222 + $0x2c] sm:$0xf]
    %v235 = vld [vmem:[%s222 + $0x30] sm:$0xf]
    %v236 = vld [vmem:[%s222 + $0x34] sm:$0xf]
    %v237 = vld [vmem:[%s222 + $0x38] sm:$0xf]
    %v238 = vld [vmem:[%s222 + $0x3c] sm:$0xf]
    %s239 = scalar_lea.vmem %s2, 2
    %v240 = vld [vmem:[%s239] sm:$0x1]
    %v242 = vlaneseq
    %v243 = vshrl.u32 %v242, 7
    %v244 = vsub.s32 0, %v243
    %v245 = vrot.slane %v240, %v244
    %v263 = vunpack.c.l.b16 %v223
    %v264 = vunpack.c.l.b16 %v224
    %v265 = vunpack.c.l.b16 %v225
    %v266 = vunpack.c.l.b16 %v226
    %v267 = vunpack.c.l.b16 %v227
    %v268 = vunpack.c.l.b16 %v228
    %v269 = vunpack.c.l.b16 %v229
    %v270 = vunpack.c.l.b16 %v230
    %v271 = vunpack.c.l.b16 %v231
    %v272 = vunpack.c.l.b16 %v232
    %v273 = vunpack.c.l.b16 %v233
    %v274 = vunpack.c.l.b16 %v234
    %v275 = vunpack.c.l.b16 %v235
    %v276 = vunpack.c.l.b16 %v236
    %v277 = vunpack.c.l.b16 %v237
    %v278 = vunpack.c.l.b16 %v238
    %v279 = vpack.c.b16 %v264, %v263
    %v280 = vpack.c.b16 %v266, %v265
    %v281 = vpack.c.b16 %v268, %v267
    %v282 = vpack.c.b16 %v270, %v269
    %v283 = vpack.c.b16 %v272, %v271
    %v284 = vpack.c.b16 %v274, %v273
    %v285 = vpack.c.b16 %v276, %v275
    %v286 = vpack.c.b16 %v278, %v277
    %295 = vmatprep.subr.bf16.mxu0 0
    %296 = vmatpush1.bf16.msra.mxu0 %v279
    %297 = vmatprep.subr.bf16.mxu0 0
    %298 = vmatpush1.bf16.msra.mxu0 %v280
    %299 = vmatprep.subr.bf16.mxu0 0
    %300 = vmatpush1.bf16.msra.mxu0 %v281
    %301 = vmatprep.subr.bf16.mxu0 0
    %302 = vmatpush1.bf16.msra.mxu0 %v282
    %303 = vmatprep.subr.bf16.mxu0 0
    %304 = vmatpush1.bf16.msra.mxu0 %v283
    %305 = vmatprep.subr.bf16.mxu0 0
    %306 = vmatpush1.bf16.msra.mxu0 %v284
    %307 = vmatprep.subr.bf16.mxu0 0
    %308 = vmatpush1.bf16.msra.mxu0 %v285
    %309 = vmatprep.subr.bf16.mxu0 0
    %310 = vmatpush1.bf16.msra.mxu0 %v286
    %311 = vmatprep.subr.bf16.mxu0 0
    %312 = vmatpush1.bf16.msra.mxu0 0
    %313 = vmatprep.subr.bf16.mxu0 0
    %314 = vmatpush1.bf16.msra.mxu0 0
    %315 = vmatprep.subr.bf16.mxu0 0
    %316 = vmatpush1.bf16.msra.mxu0 0
    %317 = vmatprep.subr.bf16.mxu0 0
    %318 = vmatpush1.bf16.msra.mxu0 0
    %319 = vmatprep.subr.bf16.mxu0 0
    %320 = vmatpush1.bf16.msra.mxu0 0
    %321 = vmatprep.subr.bf16.mxu0 0
    %322 = vmatpush1.bf16.msra.mxu0 0
    %323 = vmatprep.subr.bf16.mxu0 0
    %324 = vmatpush1.bf16.msra.mxu0 0
    %325 = vmatprep.subr.bf16.mxu0 0
    %326 = vmatpush1.bf16.msra.mxu0 0
    %327 = vmatprep.mubr.bf16.mxu0 0
    %328 = vmatmul.mubr.bf16.gmra.mrb[0].mxu0 %v221
    %v329 = vpop.f32.mrb[0].mxu0
    %v330 = vadd.f32 %v245, %v329
    %v331 = vpop.f32.mrb[0].mxu0
    %v332 = vpop.f32.mrb[0].mxu0
    %v333 = vpop.f32.mrb[0].mxu0
    %334 = vdwg.mxu0
    %vm335 = vcmask 15360
    %336 = vst.msk [vmem:[%s3] sm:$0xff] %vm335, %v330
    // Predicated region
    $region22: #{tpu_custom_call.1} parent=1 // pred_check
      _
    $region23: #{tpu_custom_call.1} parent=1 // pred_check_branch
      %338 = sbr.rel (0) target = $region25
    $region24: #{tpu_custom_call.1} parent=1 // pred_region
      _
    $region25: #{tpu_custom_call.1} parent=1 // pred_fallthru
      _
    // Predicated region
    $region26: #{tpu_custom_call.1} parent=1 // pred_check
      _
    $region27: #{tpu_custom_call.1} parent=1 // pred_check_branch
      %340 = sbr.rel (0) target = $region29
    $region28: #{tpu_custom_call.1} parent=1 // pred_region
      _
    $region29: #{tpu_custom_call.1} parent=1 // pred_fallthru
      _
    %341 = vsyncpa [#allocation3], 1
    %342 = vsyncpa [#allocation5], 1

</llo_original>
